<compile_context>
chip_gen: v7x
topology: tpu7x:2x2x1
jax: 0.10.0
libtpu: 0.0.40
codegen_flags: <defaults>
</compile_context>

<pallas_src>
import functools

import jax
import jax.numpy as jnp
import numpy as np
from jax import lax
from jax.experimental import pallas as pl
from jax.experimental.pallas import tpu as pltpu

ALPHA_COLS = 110   # fixed second dim of alpha, as in the PyTorch module
K_PAD = 128        # lane-dense key/output width (sliced back to 110 in the wrapper)


def _edge_att_kernel(len_ref, x_ref, wt_ref, out_ref, *, BB, L_J, D, wp, wf):
    base = pl.program_id(0) * BB              # first global batch index of this block

    x = x_ref[...]                            # (BB, K_PAD, D)  float32, rows >= L are zero
    wt = wt_ref[...]                          # (D, D)          pre-transposed: wt[d,e] = W[e,d]

    # att[b, k, e] = sum_d W[e, d] * x[b, k, d]   -- one flat MXU matmul.
    att = jnp.dot(x.reshape(BB * K_PAD, D), wt,
                  preferred_element_type=jnp.float32).reshape(BB, K_PAD, D)

    # scores[b, j, k] = x[b, j, :] . att[b, k, :]  (only the first L_J query rows).
    xq = x[:, :L_J, :]                                                  # aligned static slice
    scores = jnp.einsum("bjd,bkd->bjk", xq, att,
                        preferred_element_type=jnp.float32)             # (BB, L_J, K_PAD)

    shape3 = (BB, L_J, K_PAD)
    b_idx = lax.broadcasted_iota(jnp.int32, shape3, 0)
    j_idx = lax.broadcasted_iota(jnp.int32, shape3, 1)
    k_idx = lax.broadcasted_iota(jnp.int32, shape3, 2)

    # Per-batch sequence length, splat from SMEM scalars (BB is small & static).
    cur = jnp.zeros(shape3, jnp.int32)
    for i in range(BB):
        cur = jnp.where(b_idx == i, len_ref[base + i], cur)

    mask = ((k_idx >= j_idx - wp) & (k_idx <= j_idx + wf)
            & (j_idx < cur) & (k_idx < cur))

    # Masked (windowed) softmax over k, numerically stable.  exp() only sees
    # already-masked scores, so no inf is ever produced in a discarded branch.
    neg = jnp.float32(-1e30)
    s_m = jnp.where(mask, scores, neg)
    m = jnp.max(s_m, axis=-1, keepdims=True)                            # (BB, L_J, 1)
    p = jnp.where(mask, jnp.exp(s_m - m), jnp.float32(0.0))             # (BB, L_J, K_PAD)
    denom = jnp.sum(p, axis=-1, keepdims=True)
    denom = jnp.where(denom > 0, denom, jnp.float32(1.0))               # rows j >= cur -> all zero
    probs = p * pl.reciprocal(denom, approx=True)                       # divide on EUP slot

    out_ref[...] = probs                                                # one unmasked 128-lane store


def edge_att_forward(node_features, text_len, weight, wp, wf, block_b=8):
    """Returns a list of (L, 110) float32 alpha matrices, one per batch element."""
    B, L, D = node_features.shape
    assert weight.shape == (D, D)
    assert 1 <= L <= ALPHA_COLS, "mx_len must fit in the fixed 110-column alpha matrix"
    assert ALPHA_COLS <= K_PAD

    BB = int(max(1, min(block_b, B)))
    n_blocks = pl.cdiv(B, BB)
    B_pad = n_blocks * BB
    L_J = ((L + 7) // 8) * 8                  # query rows rounded up to a sublane multiple

    # Pad batch to a BB multiple (padded rows get text_len = 0 -> all-zero alpha)
    # and pad the sequence axis to K_PAD so the kernel's key dim is lane-dense.
    x = jnp.pad(node_features.astype(jnp.float32),
                ((0, B_pad - B), (0, K_PAD - L), (0, 0)))
    lens = jnp.pad(text_len.astype(jnp.int32), (0, B_pad - B))
    wt = weight.astype(jnp.float32).T         # so the kernel matmul needs no transpose

    kernel = functools.partial(_edge_att_kernel, BB=BB, L_J=L_J, D=D, wp=wp, wf=wf)

    grid_spec = pltpu.PrefetchScalarGridSpec(
        num_scalar_prefetch=1,                                         # text_len -> SMEM
        grid=(n_blocks,),
        in_specs=[
            pl.BlockSpec((BB, K_PAD, D), lambda b, lens_ref: (b, 0, 0)),   # node features block
            pl.BlockSpec((D, D), lambda b, lens_ref: (0, 0)),              # shared weight (transposed)
        ],
        out_specs=pl.BlockSpec((BB, L_J, K_PAD), lambda b, lens_ref: (b, 0, 0)),
    )

    out = pl.pallas_call(
        kernel,
        out_shape=jax.ShapeDtypeStruct((B_pad, L_J, K_PAD), jnp.float32),
        grid_spec=grid_spec,
        compiler_params=pltpu.CompilerParams(
            dimension_semantics=("parallel",),   # no cross-step state; lets v7x use both TCs
        ),
    )(lens, x, wt)

    alpha = out[:B, :L, :ALPHA_COLS]             # drop batch / row / lane padding
    return [alpha[i] for i in range(B)]


def _reference_forward(node_features, text_len, weight, wp, wf):
    nf = np.asarray(node_features, np.float32)
    W = np.asarray(weight, np.float32)
    lens = np.asarray(text_len)
    B, L, D = nf.shape
    att = nf @ W.T
    alphas = []
    for i in range(B):
        cur = int(lens[i])
        alpha = np.zeros((L, ALPHA_COLS), np.float32)
        for j in range(cur):
            s = max(j - wp, 0)
            e = min(j + wf, cur - 1)
            score = att[i, s:e + 1] @ nf[i, j]
            score = score - score.max()
            p = np.exp(score)
            p = p / p.sum()
            alpha[j, s:e + 1] = p
        alphas.append(alpha)
    return alphas


if __name__ == "__main__":
    wp, wf = 2, 2
    key = jax.random.PRNGKey(0)
    k_feat, k_w, k_feat2 = jax.random.split(key, 3)

    # Case 1: small deterministic config (args.wp = args.wf = 2, g_dim = 32).
    B, L, D = 2, 8, 32
    node_features = jax.random.normal(k_feat, (B, L, D), dtype=jnp.float32)
    text_len = jnp.array([8, 5], dtype=jnp.int32)
    # nn.Parameter zeros_((D,D)).normal_(0, var) with var = 2 / (D + D)
    var = 2.0 / (D + D)
    weight = jax.random.normal(k_w, (D, D), dtype=jnp.float32) * var

    alphas = edge_att_forward(node_features, text_len, weight, wp, wf)
    alphas = [jax.block_until_ready(a) for a in alphas]
    ref = _reference_forward(node_features, text_len, weight, wp, wf)
    # Tolerance loosened slightly vs. exact f32 to account for approx reciprocal (EUP).
    for got, exp in zip(alphas, ref):
        np.testing.assert_allclose(np.asarray(got), exp, rtol=2e-3, atol=2e-3)

    # Case 2: exercises batch-block padding (B=3 with block_b=2 -> 2 grid steps)
    # and a degenerate length-1 sequence.
    B2, L2 = 3, 16
    node_features2 = jax.random.normal(k_feat2, (B2, L2, D), dtype=jnp.float32)
    text_len2 = jnp.array([16, 9, 1], dtype=jnp.int32)
    alphas2 = edge_att_forward(node_features2, text_len2, weight, wp, wf, block_b=2)
    alphas2 = [jax.block_until_ready(a) for a in alphas2]
    ref2 = _reference_forward(node_features2, text_len2, weight, wp, wf)
    for got, exp in zip(alphas2, ref2):
        np.testing.assert_allclose(np.asarray(got), exp, rtol=2e-3, atol=2e-3)

    print("KERNEL_OK")
</pallas_src>

<mosaic_0001>
module attributes {stable_mosaic.version = 11 : i64} {
  func.func @_edge_att_kernel(%arg0: i32, %arg1: memref<2xi32, #tpu.memory_space<smem>>, %arg2: memref<2x128x32xf32, #tpu.memory_space<vmem>>, %arg3: memref<32x32xf32, #tpu.memory_space<vmem>>, %arg4: memref<2x8x128xf32, #tpu.memory_space<vmem>>) attributes {dimension_semantics = [#tpu.dimension_semantics<parallel>], iteration_bounds = array<i64: 1>, scalar_prefetch = 1 : i64, scratch_operands = 0 : i64, tpu.core_type = #tpu.core_type<tc>, window_params = [{transform_indices = @transform_0, window_bounds = array<i64: 2, 128, 32>}, {pipeline_mode = #tpu.pipeline_mode<synchronous>, transform_indices = @transform_1, window_bounds = array<i64: 32, 32>}, {transform_indices = @transform_2, window_bounds = array<i64: 2, 8, 128>}]} {
    %c2_i32 = arith.constant 2 : i32
    %0 = arith.muli %arg0, %c2_i32 : i32
    %c0 = arith.constant 0 : index
    %c0_0 = arith.constant 0 : index
    %c0_1 = arith.constant 0 : index
    %1 = vector.load %arg2[%c0, %c0_0, %c0_1] : memref<2x128x32xf32, #tpu.memory_space<vmem>>, vector<2x128x32xf32>
    %c0_2 = arith.constant 0 : index
    %c0_3 = arith.constant 0 : index
    %2 = vector.load %arg3[%c0_2, %c0_3] : memref<32x32xf32, #tpu.memory_space<vmem>>, vector<32x32xf32>
    %3 = vector.shape_cast %1 : vector<2x128x32xf32> to vector<256x32xf32>
    %cst = arith.constant dense<0.000000e+00> : vector<256x32xf32>
    %4 = tpu.matmul %3, %2, %cst {dimension_numbers = #tpu.dot_dimension_numbers<[1], [0], [0], [1], [0, 0, 1, 1], [], []>} : vector<256x32xf32>, vector<32x32xf32>, vector<256x32xf32> -> vector<256x32xf32>
    %5 = vector.shape_cast %4 : vector<256x32xf32> to vector<2x128x32xf32>
    %6 = vector.extract_strided_slice %1 {offsets = [0, 0, 0], sizes = [2, 8, 32], strides = [1, 1, 1]} : vector<2x128x32xf32> to vector<2x8x32xf32>
    "tpu.trace_start"() <{level = 10 : i32, message = "bjd,bkd->bjk"}> : () -> ()
    %cst_4 = arith.constant dense<0.000000e+00> : vector<2x8x128xf32>
    %7 = tpu.matmul %6, %5, %cst_4 {dimension_numbers = #tpu.dot_dimension_numbers<[2], [2], [1], [1], [0, 0, 0, 1, 1, 1], [0], [0]>} : vector<2x8x32xf32>, vector<2x128x32xf32>, vector<2x8x128xf32> -> vector<2x8x128xf32>
    "tpu.trace_stop"() : () -> ()
    %8 = tpu.iota {dimensions = array<i32: 0>} : vector<2x8x128xi32>
    %9 = tpu.iota {dimensions = array<i32: 1>} : vector<2x8x128xi32>
    %10 = tpu.iota {dimensions = array<i32: 2>} : vector<2x8x128xi32>
    %c0_i32 = arith.constant 0 : i32
    %11 = vector.broadcast %c0_i32 : i32 to vector<2x8x128xi32>
    %c0_i32_5 = arith.constant 0 : i32
    %12 = vector.broadcast %c0_i32_5 : i32 to vector<2x8x128xi32>
    %13 = arith.cmpi eq, %8, %12 : vector<2x8x128xi32>
    %c0_i32_6 = arith.constant 0 : i32
    %14 = arith.addi %0, %c0_i32_6 : i32
    %15 = arith.index_cast %14 : i32 to index
    %16 = memref.load %arg1[%15] : memref<2xi32, #tpu.memory_space<smem>>
    %17 = vector.broadcast %16 : i32 to vector<2x8x128xi32>
    %18 = arith.select %13, %17, %11 : vector<2x8x128xi1>, vector<2x8x128xi32>
    %c1_i32 = arith.constant 1 : i32
    %19 = vector.broadcast %c1_i32 : i32 to vector<2x8x128xi32>
    %20 = arith.cmpi eq, %8, %19 : vector<2x8x128xi32>
    %c1_i32_7 = arith.constant 1 : i32
    %21 = arith.addi %0, %c1_i32_7 : i32
    %22 = arith.index_cast %21 : i32 to index
    %23 = memref.load %arg1[%22] : memref<2xi32, #tpu.memory_space<smem>>
    %24 = vector.broadcast %23 : i32 to vector<2x8x128xi32>
    %25 = arith.select %20, %24, %18 : vector<2x8x128xi1>, vector<2x8x128xi32>
    %c2_i32_8 = arith.constant 2 : i32
    %26 = vector.broadcast %c2_i32_8 : i32 to vector<2x8x128xi32>
    %27 = arith.subi %9, %26 : vector<2x8x128xi32>
    %28 = arith.cmpi sge, %10, %27 : vector<2x8x128xi32>
    %c2_i32_9 = arith.constant 2 : i32
    %29 = vector.broadcast %c2_i32_9 : i32 to vector<2x8x128xi32>
    %30 = arith.addi %9, %29 : vector<2x8x128xi32>
    %31 = arith.cmpi sle, %10, %30 : vector<2x8x128xi32>
    %32 = arith.andi %28, %31 : vector<2x8x128xi1>
    %33 = arith.cmpi slt, %9, %25 : vector<2x8x128xi32>
    %34 = arith.andi %32, %33 : vector<2x8x128xi1>
    %35 = arith.cmpi slt, %10, %25 : vector<2x8x128xi32>
    %36 = arith.andi %34, %35 : vector<2x8x128xi1>
    %cst_10 = arith.constant -1.000000e+30 : f32
    %37 = vector.broadcast %cst_10 : f32 to vector<2x8x128xf32>
    %38 = arith.select %36, %7, %37 : vector<2x8x128xi1>, vector<2x8x128xf32>
    %cst_11 = arith.constant dense<0xFF800000> : vector<2x8xf32>
    %39 = vector.multi_reduction <maximumf>, %38, %cst_11 [2] : vector<2x8x128xf32> to vector<2x8xf32>
    %40 = vector.shape_cast %39 : vector<2x8xf32> to vector<2x8x1xf32>
    %41 = vector.broadcast %40 : vector<2x8x1xf32> to vector<2x8x128xf32>
    %42 = arith.subf %38, %41 : vector<2x8x128xf32>
    %43 = math.exp %42 : vector<2x8x128xf32>
    %cst_12 = arith.constant 0.000000e+00 : f32
    %44 = vector.broadcast %cst_12 : f32 to vector<2x8x128xf32>
    %45 = arith.select %36, %43, %44 : vector<2x8x128xi1>, vector<2x8x128xf32>
    %cst_13 = arith.constant dense<0.000000e+00> : vector<2x8xf32>
    %46 = vector.multi_reduction <add>, %45, %cst_13 [2] : vector<2x8x128xf32> to vector<2x8xf32>
    %47 = vector.shape_cast %46 : vector<2x8xf32> to vector<2x8x1xf32>
    %cst_14 = arith.constant 0.000000e+00 : f32
    %48 = vector.broadcast %cst_14 : f32 to vector<2x8x1xf32>
    %49 = arith.cmpf ogt, %47, %48 : vector<2x8x1xf32>
    %cst_15 = arith.constant 1.000000e+00 : f32
    %50 = vector.broadcast %cst_15 : f32 to vector<2x8x1xf32>
    %51 = arith.select %49, %47, %50 : vector<2x8x1xi1>, vector<2x8x1xf32>
    %52 = tpu.reciprocal %51 {approx = true} : vector<2x8x1xf32> -> vector<2x8x1xf32>
    %53 = vector.broadcast %52 : vector<2x8x1xf32> to vector<2x8x128xf32>
    %54 = arith.mulf %45, %53 : vector<2x8x128xf32>
    %c0_16 = arith.constant 0 : index
    %c0_17 = arith.constant 0 : index
    %c0_18 = arith.constant 0 : index
    %55 = vector.load %arg4[%c0_16, %c0_17, %c0_18] : memref<2x8x128xf32, #tpu.memory_space<vmem>>, vector<2x8x128xf32>
    tpu.vector_store %arg4[%c0_16, %c0_17, %c0_18], %54 {strides = array<i32>} : memref<2x8x128xf32, #tpu.memory_space<vmem>>, vector<2x8x128xf32>,
    return
  }
  func.func @transform_0(%arg0: i32, %arg1: memref<2xi32, #tpu.memory_space<smem>>) -> (i32, i32, i32) {
    %c0_i32 = arith.constant 0 : i32
    %c0_i32_0 = arith.constant 0 : i32
    %c0_i32_1 = arith.constant 0 : i32
    return %arg0, %c0_i32, %c0_i32_0 : i32, i32, i32
  }
  func.func @transform_1(%arg0: i32, %arg1: memref<2xi32, #tpu.memory_space<smem>>) -> (i32, i32) {
    %c0_i32 = arith.constant 0 : i32
    %c0_i32_0 = arith.constant 0 : i32
    %c0_i32_1 = arith.constant 0 : i32
    return %c0_i32, %c0_i32_0 : i32, i32
  }
  func.func @transform_2(%arg0: i32, %arg1: memref<2xi32, #tpu.memory_space<smem>>) -> (i32, i32, i32) {
    %c0_i32 = arith.constant 0 : i32
    %c0_i32_0 = arith.constant 0 : i32
    %c0_i32_1 = arith.constant 0 : i32
    return %arg0, %c0_i32, %c0_i32_0 : i32, i32, i32
  }
}

</mosaic_0001>

<llo_original>
// kernel: tpu_custom_call.1
$region0: #{tpu_custom_call.1}
  #allocation0 [shape = 'u32[]', space=smem, size = 0x4, offset = 0x4, fixed_abs, tag = 'smem constant byte address 0x4 - core index']
  #allocation1 [shape = 'u32[144,128]{1,0:T(1,128)}', space=vmem, size = 0x12000, scoped, tag = 'internal scratch']
  #allocation2 [shape = 's32[1]{0}', space=sflag, size = 0x4, scoped, tag = 'scoped memory for tpu_custom_call.1']
  #allocation3 [shape = 'u8[512]{0}', space=smem, size = 0x200, scoped, tag = 'prefetched SMEM operand 0']
  %s0 = inlined_call_operand.vmem [shape: s32[2], index: 0, kind: input, shape index: {}]
  %s1 = inlined_call_operand.vmem [shape: f32[2,128,32], index: 1, kind: input, shape index: {}]
  %s2 = inlined_call_operand.vmem [shape: f32[32,32], index: 2, kind: input, shape index: {}]
  %s3 = inlined_call_operand.hbm [shape: f32[2,8,128], index: 3, kind: output, shape index: {}]
  %s4 = sld [smem:[#allocation0]]
  $region18: #{tpu_custom_call.1} parent=0
    _
  %s6 = ssub.s32 1, %s4
  %s7 = scalar_select 0, %s6, %s4
  %s8 = sshll.u32 %s0, 4
  %s9 = int_to_ptr.vmem [resolvable:$true] %s8
  %11 = dma.vmem_to_smem %s9, 16, [#allocation3], [#allocation2]
  %12 = dma.done [#allocation2], 16
  %13 = sfence
  $region1: #{tpu_custom_call.1} parent=0
    #allocation4 [shape = 'u8[8192]{0}', space=vmem, size = 0x2000, scoped, tag = 'output window, operand 0, single buffered']
    #allocation5 [shape = 's32[1]{0}', space=sflag, size = 0x4, scoped, tag = 'scoped memory for tpu_custom_call.1']
    %14 = vsyncpa [#allocation5], 0
    // Predicated region
    $region2: #{tpu_custom_call.1} parent=1 // pred_check
      _
    $region3: #{tpu_custom_call.1} parent=1 // pred_check_branch
      %16 = sbr.rel (0) target = $region5
    $region4: #{tpu_custom_call.1} parent=1 // pred_region
      _
    $region5: #{tpu_custom_call.1} parent=1 // pred_fallthru
      _
    // Predicated region
    $region6: #{tpu_custom_call.1} parent=1 // pred_check
      _
    $region7: #{tpu_custom_call.1} parent=1 // pred_check_branch
      %18 = sbr.rel (0) target = $region9
    $region8: #{tpu_custom_call.1} parent=1 // pred_region
      _
    $region9: #{tpu_custom_call.1} parent=1 // pred_fallthru
      _
    %s19 = smul.u32 0, 2
    %v20 = vld [vmem:[%s1] sm:$0xff]
    %v21 = vld [vmem:[%s1 + $0x8] sm:$0xff]
    %v22 = vld [vmem:[%s1 + $0x10] sm:$0xff]
    %v23 = vld [vmem:[%s1 + $0x18] sm:$0xff]
    %v24 = vld [vmem:[%s1 + $0x20] sm:$0xff]
    %v25 = vld [vmem:[%s1 + $0x28] sm:$0xff]
    %v26 = vld [vmem:[%s1 + $0x30] sm:$0xff]
    %v27 = vld [vmem:[%s1 + $0x38] sm:$0xff]
    %v28 = vld [vmem:[%s1 + $0x40] sm:$0xff]
    %v29 = vld [vmem:[%s1 + $0x48] sm:$0xff]
    %v30 = vld [vmem:[%s1 + $0x50] sm:$0xff]
    %v31 = vld [vmem:[%s1 + $0x58] sm:$0xff]
    %v32 = vld [vmem:[%s1 + $0x60] sm:$0xff]
    %v33 = vld [vmem:[%s1 + $0x68] sm:$0xff]
    %v34 = vld [vmem:[%s1 + $0x70] sm:$0xff]
    %v35 = vld [vmem:[%s1 + $0x78] sm:$0xff]
    %v36 = vld [vmem:[%s1 + $0x80] sm:$0xff]
    %v37 = vld [vmem:[%s1 + $0x88] sm:$0xff]
    %v38 = vld [vmem:[%s1 + $0x90] sm:$0xff]
    %v39 = vld [vmem:[%s1 + $0x98] sm:$0xff]
    %v40 = vld [vmem:[%s1 + $0xa0] sm:$0xff]
    %v41 = vld [vmem:[%s1 + $0xa8] sm:$0xff]
    %v42 = vld [vmem:[%s1 + $0xb0] sm:$0xff]
    %v43 = vld [vmem:[%s1 + $0xb8] sm:$0xff]
    %v44 = vld [vmem:[%s1 + $0xc0] sm:$0xff]
    %v45 = vld [vmem:[%s1 + $0xc8] sm:$0xff]
    %v46 = vld [vmem:[%s1 + $0xd0] sm:$0xff]
    %v47 = vld [vmem:[%s1 + $0xd8] sm:$0xff]
    %v48 = vld [vmem:[%s1 + $0xe0] sm:$0xff]
    %v49 = vld [vmem:[%s1 + $0xe8] sm:$0xff]
    %v50 = vld [vmem:[%s1 + $0xf0] sm:$0xff]
    %v51 = vld [vmem:[%s1 + $0xf8] sm:$0xff]
    %v52 = vld [vmem:[%s2] sm:$0xff]
    %v53 = vld [vmem:[%s2 + $0x8] sm:$0xff]
    %v54 = vld [vmem:[%s2 + $0x10] sm:$0xff]
    %v55 = vld [vmem:[%s2 + $0x18] sm:$0xff]
    %vm56 = vcmask 261120
    %v58 = vsel %vm56, %v20, 0
    %v61 = vsel %vm56, %v21, 0
    %v64 = vsel %vm56, %v22, 0
    %v67 = vsel %vm56, %v23, 0
    %v70 = vsel %vm56, %v24, 0
    %v73 = vsel %vm56, %v25, 0
    %v76 = vsel %vm56, %v26, 0
    %v79 = vsel %vm56, %v27, 0
    %v82 = vsel %vm56, %v28, 0
    %v85 = vsel %vm56, %v29, 0
    %v88 = vsel %vm56, %v30, 0
    %v91 = vsel %vm56, %v31, 0
    %v94 = vsel %vm56, %v32, 0
    %v97 = vsel %vm56, %v33, 0
    %v100 = vsel %vm56, %v34, 0
    %v103 = vsel %vm56, %v35, 0
    %v106 = vsel %vm56, %v36, 0
    %v109 = vsel %vm56, %v37, 0
    %v112 = vsel %vm56, %v38, 0
    %v115 = vsel %vm56, %v39, 0
    %v118 = vsel %vm56, %v40, 0
    %v121 = vsel %vm56, %v41, 0
    %v124 = vsel %vm56, %v42, 0
    %v127 = vsel %vm56, %v43, 0
    %v130 = vsel %vm56, %v44, 0
    %v133 = vsel %vm56, %v45, 0
    %v136 = vsel %vm56, %v46, 0
    %v139 = vsel %vm56, %v47, 0
    %v142 = vsel %vm56, %v48, 0
    %v145 = vsel %vm56, %v49, 0
    %v148 = vsel %vm56, %v50, 0
    %v151 = vsel %vm56, %v51, 0
    %153 = vmatprep.subr.mxu0 0.0
    %154 = vmatpush1.msra.mxu0 %v52
    %155 = vmatprep.subr.mxu0 0.0
    %156 = vmatpush1.msra.mxu0 %v53
    %157 = vmatprep.subr.mxu0 0.0
    %158 = vmatpush1.msra.mxu0 %v54
    %159 = vmatprep.subr.mxu0 0.0
    %160 = vmatpush1.msra.mxu0 %v55
    %161 = vmatprep.subr.mxu0 0.0
    %162 = vmatpush1.msra.mxu0 0.0
    %163 = vmatprep.subr.mxu0 0.0
    %164 = vmatpush1.msra.mxu0 0.0
    %165 = vmatprep.subr.mxu0 0.0
    %166 = vmatpush1.msra.mxu0 0.0
    %167 = vmatprep.subr.mxu0 0.0
    %168 = vmatpush1.msra.mxu0 0.0
    %169 = vmatprep.subr.mxu0 0.0
    %170 = vmatpush1.msra.mxu0 0.0
    %171 = vmatprep.subr.mxu0 0.0
    %172 = vmatpush1.msra.mxu0 0.0
    %173 = vmatprep.subr.mxu0 0.0
    %174 = vmatpush1.msra.mxu0 0.0
    %175 = vmatprep.subr.mxu0 0.0
    %176 = vmatpush1.msra.mxu0 0.0
    %177 = vmatprep.subr.mxu0 0.0
    %178 = vmatpush1.msra.mxu0 0.0
    %179 = vmatprep.subr.mxu0 0.0
    %180 = vmatpush1.msra.mxu0 0.0
    %181 = vmatprep.subr.mxu0 0.0
    %182 = vmatpush1.msra.mxu0 0.0
    %183 = vmatprep.subr.mxu0 0.0
    %184 = vmatpush1.msra.mxu0 0.0
    %185 = vmatprep.subr.mxu0 0.0
    %186 = vmatpush1.msra.mxu0 0.0
    %187 = vmatprep.subr.mxu0 0.0
    %188 = vmatpush1.msra.mxu0 0.0
    %189 = vmatprep.subr.mxu0 0.0
    %190 = vmatpush1.msra.mxu0 0.0
    %191 = vmatprep.subr.mxu0 0.0
    %192 = vmatpush1.msra.mxu0 0.0
    %193 = vmatprep.subr.mxu0 0.0
    %194 = vmatpush1.msra.mxu0 0.0
    %195 = vmatprep.subr.mxu0 0.0
    %196 = vmatpush1.msra.mxu0 0.0
    %197 = vmatprep.subr.mxu0 0.0
    %198 = vmatpush1.msra.mxu0 0.0
    %199 = vmatprep.subr.mxu0 0.0
    %200 = vmatpush1.msra.mxu0 0.0
    %201 = vmatprep.subr.mxu0 0.0
    %202 = vmatpush1.msra.mxu0 0.0
    %203 = vmatprep.subr.mxu0 0.0
    %204 = vmatpush1.msra.mxu0 0.0
    %205 = vmatprep.subr.mxu0 0.0
    %206 = vmatpush1.msra.mxu0 0.0
    %207 = vmatprep.subr.mxu0 0.0
    %208 = vmatpush1.msra.mxu0 0.0
    %209 = vmatprep.subr.mxu0 0.0
    %210 = vmatpush1.msra.mxu0 0.0
    %211 = vmatprep.subr.mxu0 0.0
    %212 = vmatpush1.msra.mxu0 0.0
    %213 = vmatprep.subr.mxu0 0.0
    %214 = vmatpush1.msra.mxu0 0.0
    %215 = vmatprep.subr.mxu0 0.0
    %216 = vmatpush1.msra.mxu0 0.0
    %217 = vmatprep.mubr.f32.mxu0 0.0
    %218 = vmatmul.mubr.f32.gmra.mrb[0].mxu0 %v58
    %v219 = vpop.f32.mrb[0].mxu0
    %v220 = vadd.f32 0.0, %v219
    %v221 = vpop.f32.mrb[0].mxu0
    %222 = vmatprep.mubr.f32.mxu0 0.0
    %223 = vmatmul.mubr.f32.gmra.mrb[0].mxu0 %v61
    %v224 = vpop.f32.mrb[0].mxu0
    %v225 = vadd.f32 0.0, %v224
    %v226 = vpop.f32.mrb[0].mxu0
    %227 = vmatprep.mubr.f32.mxu0 0.0
    %228 = vmatmul.mubr.f32.gmra.mrb[0].mxu0 %v64
    %v229 = vpop.f32.mrb[0].mxu0
    %v230 = vadd.f32 0.0, %v229
    %v231 = vpop.f32.mrb[0].mxu0
    %232 = vmatprep.mubr.f32.mxu0 0.0
    %233 = vmatmul.mubr.f32.gmra.mrb[0].mxu0 %v67
    %v234 = vpop.f32.mrb[0].mxu0
    %v235 = vadd.f32 0.0, %v234
    %v236 = vpop.f32.mrb[0].mxu0
    %237 = vmatprep.mubr.f32.mxu0 0.0
    %238 = vmatmul.mubr.f32.gmra.mrb[0].mxu0 %v70
    %v239 = vpop.f32.mrb[0].mxu0
    %v240 = vadd.f32 0.0, %v239
    %v241 = vpop.f32.mrb[0].mxu0
    %242 = vmatprep.mubr.f32.mxu0 0.0
    %243 = vmatmul.mubr.f32.gmra.mrb[0].mxu0 %v73
    %v244 = vpop.f32.mrb[0].mxu0
    %v245 = vadd.f32 0.0, %v244
    %v246 = vpop.f32.mrb[0].mxu0
    %247 = vmatprep.mubr.f32.mxu0 0.0
    %248 = vmatmul.mubr.f32.gmra.mrb[0].mxu0 %v76
    %v249 = vpop.f32.mrb[0].mxu0
    %v250 = vadd.f32 0.0, %v249
    %v251 = vpop.f32.mrb[0].mxu0
    %252 = vmatprep.mubr.f32.mxu0 0.0
    %253 = vmatmul.mubr.f32.gmra.mrb[0].mxu0 %v79
    %v254 = vpop.f32.mrb[0].mxu0
    %v255 = vadd.f32 0.0, %v254
    %v256 = vpop.f32.mrb[0].mxu0
    %257 = vmatprep.mubr.f32.mxu0 0.0
    %258 = vmatmul.mubr.f32.gmra.mrb[0].mxu0 %v82
    %v259 = vpop.f32.mrb[0].mxu0
    %v260 = vadd.f32 0.0, %v259
    %v261 = vpop.f32.mrb[0].mxu0
    %262 = vmatprep.mubr.f32.mxu0 0.0
    %263 = vmatmul.mubr.f32.gmra.mrb[0].mxu0 %v85
    %v264 = vpop.f32.mrb[0].mxu0
    %v265 = vadd.f32 0.0, %v264
    %v266 = vpop.f32.mrb[0].mxu0
    %267 = vmatprep.mubr.f32.mxu0 0.0
    %268 = vmatmul.mubr.f32.gmra.mrb[0].mxu0 %v88
    %v269 = vpop.f32.mrb[0].mxu0
    %v270 = vadd.f32 0.0, %v269
    %v271 = vpop.f32.mrb[0].mxu0
    %272 = vmatprep.mubr.f32.mxu0 0.0
    %273 = vmatmul.mubr.f32.gmra.mrb[0].mxu0 %v91
    %v274 = vpop.f32.mrb[0].mxu0
    %v275 = vadd.f32 0.0, %v274
    %v276 = vpop.f32.mrb[0].mxu0
    %277 = vmatprep.mubr.f32.mxu0 0.0
    %278 = vmatmul.mubr.f32.gmra.mrb[0].mxu0 %v94
    %v279 = vpop.f32.mrb[0].mxu0
    %v280 = vadd.f32 0.0, %v279
    %v281 = vpop.f32.mrb[0].mxu0
    %282 = vmatprep.mubr.f32.mxu0 0.0
    %283 = vmatmul.mubr.f32.gmra.mrb[0].mxu0 %v97
    %v284 = vpop.f32.mrb[0].mxu0
    %v285 = vadd.f32 0.0, %v284
    %v286 = vpop.f32.mrb[0].mxu0
    %287 = vmatprep.mubr.f32.mxu0 0.0
    %288 = vmatmul.mubr.f32.gmra.mrb[0].mxu0 %v100
    %v289 = vpop.f32.mrb[0].mxu0
    %v290 = vadd.f32 0.0, %v289
    %v291 = vpop.f32.mrb[0].mxu0
    %292 = vmatprep.mubr.f32.mxu0 0.0
    %293 = vmatmul.mubr.f32.gmra.mrb[0].mxu0 %v103
    %v294 = vpop.f32.mrb[0].mxu0
    %v295 = vadd.f32 0.0, %v294
    %v296 = vpop.f32.mrb[0].mxu0
    %297 = vmatprep.mubr.f32.mxu0 0.0
    %298 = vmatmul.mubr.f32.gmra.mrb[0].mxu0 %v106
    %v299 = vpop.f32.mrb[0].mxu0
    %v300 = vadd.f32 0.0, %v299
    %v301 = vpop.f32.mrb[0].mxu0
    %302 = vmatprep.mubr.f32.mxu0 0.0
    %303 = vmatmul.mubr.f32.gmra.mrb[0].mxu0 %v109
    %v304 = vpop.f32.mrb[0].mxu0
    %v305 = vadd.f32 0.0, %v304
    %v306 = vpop.f32.mrb[0].mxu0
    %307 = vmatprep.mubr.f32.mxu0 0.0
    %308 = vmatmul.mubr.f32.gmra.mrb[0].mxu0 %v112
    %v309 = vpop.f32.mrb[0].mxu0
    %v310 = vadd.f32 0.0, %v309
    %v311 = vpop.f32.mrb[0].mxu0
    %312 = vmatprep.mubr.f32.mxu0 0.0
    %313 = vmatmul.mubr.f32.gmra.mrb[0].mxu0 %v115
    %v314 = vpop.f32.mrb[0].mxu0
    %v315 = vadd.f32 0.0, %v314
    %v316 = vpop.f32.mrb[0].mxu0
    %317 = vmatprep.mubr.f32.mxu0 0.0
    %318 = vmatmul.mubr.f32.gmra.mrb[0].mxu0 %v118
    %v319 = vpop.f32.mrb[0].mxu0
    %v320 = vadd.f32 0.0, %v319
    %v321 = vpop.f32.mrb[0].mxu0
    %322 = vmatprep.mubr.f32.mxu0 0.0
    %323 = vmatmul.mubr.f32.gmra.mrb[0].mxu0 %v121
    %v324 = vpop.f32.mrb[0].mxu0
    %v325 = vadd.f32 0.0, %v324
    %v326 = vpop.f32.mrb[0].mxu0
    %327 = vmatprep.mubr.f32.mxu0 0.0
    %328 = vmatmul.mubr.f32.gmra.mrb[0].mxu0 %v124
    %v329 = vpop.f32.mrb[0].mxu0
    %v330 = vadd.f32 0.0, %v329
    %v331 = vpop.f32.mrb[0].mxu0
    %332 = vmatprep.mubr.f32.mxu0 0.0
    %333 = vmatmul.mubr.f32.gmra.mrb[0].mxu0 %v127
    %v334 = vpop.f32.mrb[0].mxu0
    %v335 = vadd.f32 0.0, %v334
    %v336 = vpop.f32.mrb[0].mxu0
    %337 = vmatprep.mubr.f32.mxu0 0.0
    %338 = vmatmul.mubr.f32.gmra.mrb[0].mxu0 %v130
    %v339 = vpop.f32.mrb[0].mxu0
    %v340 = vadd.f32 0.0, %v339
    %v341 = vpop.f32.mrb[0].mxu0
    %342 = vmatprep.mubr.f32.mxu0 0.0
    %343 = vmatmul.mubr.f32.gmra.mrb[0].mxu0 %v133
    %v344 = vpop.f32.mrb[0].mxu0
    %v345 = vadd.f32 0.0, %v344
    %v346 = vpop.f32.mrb[0].mxu0
    %347 = vmatprep.mubr.f32.mxu0 0.0
    %348 = vmatmul.mubr.f32.gmra.mrb[0].mxu0 %v136
    %v349 = vpop.f32.mrb[0].mxu0
    %v350 = vadd.f32 0.0, %v349
    %v351 = vpop.f32.mrb[0].mxu0
    %352 = vmatprep.mubr.f32.mxu0 0.0
    %353 = vmatmul.mubr.f32.gmra.mrb[0].mxu0 %v139
    %v354 = vpop.f32.mrb[0].mxu0
    %v355 = vadd.f32 0.0, %v354
    %v356 = vpop.f32.mrb[0].mxu0
    %357 = vmatprep.mubr.f32.mxu0 0.0
    %358 = vmatmul.mubr.f32.gmra.mrb[0].mxu0 %v142
    %v359 = vpop.f32.mrb[0].mxu0
    %v360 = vadd.f32 0.0, %v359
    %v361 = vpop.f32.mrb[0].mxu0
    %362 = vmatprep.mubr.f32.mxu0 0.0
    %363 = vmatmul.mubr.f32.gmra.mrb[0].mxu0 %v145
    %v364 = vpop.f32.mrb[0].mxu0
    %v365 = vadd.f32 0.0, %v364
    %v366 = vpop.f32.mrb[0].mxu0
    %367 = vmatprep.mubr.f32.mxu0 0.0
    %368 = vmatmul.mubr.f32.gmra.mrb[0].mxu0 %v148
    %v369 = vpop.f32.mrb[0].mxu0
    %v370 = vadd.f32 0.0, %v369
    %v371 = vpop.f32.mrb[0].mxu0
    %372 = vmatprep.mubr.f32.mxu0 0.0
    %373 = vmatmul.mubr.f32.gmra.mrb[0].mxu0 %v151
    %v374 = vpop.f32.mrb[0].mxu0
    %v375 = vadd.f32 0.0, %v374
    %v376 = vpop.f32.mrb[0].mxu0
    %377 = vdwg.mxu0
    %v379 = vsel %vm56, %v220, 0
    %v382 = vsel %vm56, %v225, 0
    %v385 = vsel %vm56, %v230, 0
    %v388 = vsel %vm56, %v235, 0
    %v391 = vsel %vm56, %v240, 0
    %v394 = vsel %vm56, %v245, 0
    %v397 = vsel %vm56, %v250, 0
    %v400 = vsel %vm56, %v255, 0
    %v403 = vsel %vm56, %v260, 0
    %v406 = vsel %vm56, %v265, 0
    %v409 = vsel %vm56, %v270, 0
    %v412 = vsel %vm56, %v275, 0
    %v415 = vsel %vm56, %v280, 0
    %v418 = vsel %vm56, %v285, 0
    %v421 = vsel %vm56, %v290, 0
    %v424 = vsel %vm56, %v295, 0
    %426 = vmatprep.subr.mxu0 0.0
    %427 = vmatpush1.xpose.msra.mxu0 %v379
    %428 = vmatprep.subr.mxu0 0.0
    %429 = vmatpush1.xpose.msra.mxu0 %v382
    %430 = vmatprep.subr.mxu0 0.0
    %431 = vmatpush1.xpose.msra.mxu0 %v385
    %432 = vmatprep.subr.mxu0 0.0
    %433 = vmatpush1.xpose.msra.mxu0 %v388
    %434 = vmatprep.subr.mxu0 0.0
    %435 = vmatpush1.xpose.msra.mxu0 %v391
    %436 = vmatprep.subr.mxu0 0.0
    %437 = vmatpush1.xpose.msra.mxu0 %v394
    %438 = vmatprep.subr.mxu0 0.0
    %439 = vmatpush1.xpose.msra.mxu0 %v397
    %440 = vmatprep.subr.mxu0 0.0
    %441 = vmatpush1.xpose.msra.mxu0 %v400
    %442 = vmatprep.subr.mxu0 0.0
    %443 = vmatpush1.xpose.msra.mxu0 %v403
    %444 = vmatprep.subr.mxu0 0.0
    %445 = vmatpush1.xpose.msra.mxu0 %v406
    %446 = vmatprep.subr.mxu0 0.0
    %447 = vmatpush1.xpose.msra.mxu0 %v409
    %448 = vmatprep.subr.mxu0 0.0
    %449 = vmatpush1.xpose.msra.mxu0 %v412
    %450 = vmatprep.subr.mxu0 0.0
    %451 = vmatpush1.xpose.msra.mxu0 %v415
    %452 = vmatprep.subr.mxu0 0.0
    %453 = vmatpush1.xpose.msra.mxu0 %v418
    %454 = vmatprep.subr.mxu0 0.0
    %455 = vmatpush1.xpose.msra.mxu0 %v421
    %456 = vmatprep.subr.mxu0 0.0
    %457 = vmatpush1.xpose.msra.mxu0 %v424
    %458 = vmatprep.subr.mxu0 0.0
    %459 = vmatpush1.xpose.msra.mxu0 0.0
    %460 = vmatprep.subr.mxu0 0.0
    %461 = vmatpush1.xpose.msra.mxu0 0.0
    %462 = vmatprep.subr.mxu0 0.0
    %463 = vmatpush1.xpose.msra.mxu0 0.0
    %464 = vmatprep.subr.mxu0 0.0
    %465 = vmatpush1.xpose.msra.mxu0 0.0
    %466 = vmatprep.subr.mxu0 0.0
    %467 = vmatpush1.xpose.msra.mxu0 0.0
    %468 = vmatprep.subr.mxu0 0.0
    %469 = vmatpush1.xpose.msra.mxu0 0.0
    %470 = vmatprep.subr.mxu0 0.0
    %471 = vmatpush1.xpose.msra.mxu0 0.0
    %472 = vmatprep.subr.mxu0 0.0
    %473 = vmatpush1.xpose.msra.mxu0 0.0
    %474 = vmatprep.subr.mxu0 0.0
    %475 = vmatpush1.xpose.msra.mxu0 0.0
    %476 = vmatprep.subr.mxu0 0.0
    %477 = vmatpush1.xpose.msra.mxu0 0.0
    %478 = vmatprep.subr.mxu0 0.0
    %479 = vmatpush1.xpose.msra.mxu0 0.0
    %480 = vmatprep.subr.mxu0 0.0
    %481 = vmatpush1.xpose.msra.mxu0 0.0
    %482 = vmatprep.subr.mxu0 0.0
    %483 = vmatpush1.xpose.msra.mxu0 0.0
    %484 = vmatprep.subr.mxu0 0.0
    %485 = vmatpush1.xpose.msra.mxu0 0.0
    %486 = vmatprep.subr.mxu0 0.0
    %487 = vmatpush1.xpose.msra.mxu0 0.0
    %488 = vmatprep.subr.mxu0 0.0
    %489 = vmatpush1.xpose.msra.mxu0 0.0
    %490 = vmatprep.mubr.f32.mxu0 0.0
    %491 = vmatmul.mubr.f32.gmra.mrb[0].mxu0 %v58
    %v492 = vpop.f32.mrb[0].mxu0
    %v493 = vadd.f32 0.0, %v492
    %v494 = vpop.f32.mrb[0].mxu0
    %495 = vdwg.mxu0
    %v497 = vsel %vm56, %v300, 0
    %v500 = vsel %vm56, %v305, 0
    %v503 = vsel %vm56, %v310, 0
    %v506 = vsel %vm56, %v315, 0
    %v509 = vsel %vm56, %v320, 0
    %v512 = vsel %vm56, %v325, 0
    %v515 = vsel %vm56, %v330, 0
    %v518 = vsel %vm56, %v335, 0
    %v521 = vsel %vm56, %v340, 0
    %v524 = vsel %vm56, %v345, 0
    %v527 = vsel %vm56, %v350, 0
    %v530 = vsel %vm56, %v355, 0
    %v533 = vsel %vm56, %v360, 0
    %v536 = vsel %vm56, %v365, 0
    %v539 = vsel %vm56, %v370, 0
    %v542 = vsel %vm56, %v375, 0
    %544 = vmatprep.subr.mxu0 0.0
    %545 = vmatpush1.xpose.msra.mxu0 %v497
    %546 = vmatprep.subr.mxu0 0.0
    %547 = vmatpush1.xpose.msra.mxu0 %v500
    %548 = vmatprep.subr.mxu0 0.0
    %549 = vmatpush1.xpose.msra.mxu0 %v503
    %550 = vmatprep.subr.mxu0 0.0
    %551 = vmatpush1.xpose.msra.mxu0 %v506
    %552 = vmatprep.subr.mxu0 0.0
    %553 = vmatpush1.xpose.msra.mxu0 %v509
    %554 = vmatprep.subr.mxu0 0.0
    %555 = vmatpush1.xpose.msra.mxu0 %v512
    %556 = vmatprep.subr.mxu0 0.0
    %557 = vmatpush1.xpose.msra.mxu0 %v515
    %558 = vmatprep.subr.mxu0 0.0
    %559 = vmatpush1.xpose.msra.mxu0 %v518
    %560 = vmatprep.subr.mxu0 0.0
    %561 = vmatpush1.xpose.msra.mxu0 %v521
    %562 = vmatprep.subr.mxu0 0.0
    %563 = vmatpush1.xpose.msra.mxu0 %v524
    %564 = vmatprep.subr.mxu0 0.0
    %565 = vmatpush1.xpose.msra.mxu0 %v527
    %566 = vmatprep.subr.mxu0 0.0
    %567 = vmatpush1.xpose.msra.mxu0 %v530
    %568 = vmatprep.subr.mxu0 0.0
    %569 = vmatpush1.xpose.msra.mxu0 %v533
    %570 = vmatprep.subr.mxu0 0.0
    %571 = vmatpush1.xpose.msra.mxu0 %v536
    %572 = vmatprep.subr.mxu0 0.0
    %573 = vmatpush1.xpose.msra.mxu0 %v539
    %574 = vmatprep.subr.mxu0 0.0
    %575 = vmatpush1.xpose.msra.mxu0 %v542
    %576 = vmatprep.subr.mxu0 0.0
    %577 = vmatpush1.xpose.msra.mxu0 0.0
    %578 = vmatprep.subr.mxu0 0.0
    %579 = vmatpush1.xpose.msra.mxu0 0.0
    %580 = vmatprep.subr.mxu0 0.0
    %581 = vmatpush1.xpose.msra.mxu0 0.0
    %582 = vmatprep.subr.mxu0 0.0
    %583 = vmatpush1.xpose.msra.mxu0 0.0
    %584 = vmatprep.subr.mxu0 0.0
    %585 = vmatpush1.xpose.msra.mxu0 0.0
    %586 = vmatprep.subr.mxu0 0.0
    %587 = vmatpush1.xpose.msra.mxu0 0.0
    %588 = vmatprep.subr.mxu0 0.0
    %589 = vmatpush1.xpose.msra.mxu0 0.0
    %590 = vmatprep.subr.mxu0 0.0
    %591 = vmatpush1.xpose.msra.mxu0 0.0
    %592 = vmatprep.subr.mxu0 0.0
    %593 = vmatpush1.xpose.msra.mxu0 0.0
    %594 = vmatprep.subr.mxu0 0.0
    %595 = vmatpush1.xpose.msra.mxu0 0.0
    %596 = vmatprep.subr.mxu0 0.0
    %597 = vmatpush1.xpose.msra.mxu0 0.0
    %598 = vmatprep.subr.mxu0 0.0
    %599 = vmatpush1.xpose.msra.mxu0 0.0
    %600 = vmatprep.subr.mxu0 0.0
    %601 = vmatpush1.xpose.msra.mxu0 0.0
    %602 = vmatprep.subr.mxu0 0.0
    %603 = vmatpush1.xpose.msra.mxu0 0.0
    %604 = vmatprep.subr.mxu0 0.0
    %605 = vmatpush1.xpose.msra.mxu0 0.0
    %606 = vmatprep.subr.mxu0 0.0
    %607 = vmatpush1.xpose.msra.mxu0 0.0
    %608 = vmatprep.mubr.f32.mxu0 0.0
    %609 = vmatmul.mubr.f32.gmra.mrb[0].mxu0 %v106
    %v610 = vpop.f32.mrb[0].mxu0
    %v611 = vadd.f32 0.0, %v610
    %v612 = vpop.f32.mrb[0].mxu0
    %613 = vdwg.mxu0
    %v614 = vlaneseq
    %v615 = vshrl.u32 %v614, 7
    %v616 = vlaneseq
    %v617 = vand.u32 %v616, 127
    %s618 = sld [smem:[#allocation3 + %s19]]
    %v619 = vstv %s618
    %s620 = sadd.s32 %s19, 1
    %s621 = sld [smem:[#allocation3 + %s620]]
    %v622 = vstv %s621
    %v623 = vsub.s32 %v615, 2
    %vm624 = vcmp.ge.s32.totalorder %v617, %v623
    %v625 = vadd.s32 %v615, 2
    %vm626 = vcmp.le.s32.totalorder %v617, %v625
    %vm627 = vmand %vm624, %vm626
    %vm628 = vcmp.lt.s32.totalorder %v615, %v619
    %vm629 = vcmp.lt.s32.totalorder %v615, %v622
    %vm630 = vmand %vm627, %vm628
    %vm631 = vmand %vm627, %vm629
    %vm632 = vcmp.lt.s32.totalorder %v617, %v619
    %vm633 = vcmp.lt.s32.totalorder %v617, %v622
    %vm634 = vmand %vm630, %vm632
    %vm635 = vmand %vm631, %vm633
    %v636 = vsel %vm634, %v493, -1e+30
    %v637 = vsel %vm635, %v611, -1e+30
    %638 = vmax.xlane.f32.xlu0 %v636
    %v639 = vpop.xlane.xlu0 %638
    %640 = vmax.xlane.f32.xlu0 %v637
    %v641 = vpop.xlane.xlu0 %640
    %v642 = vsub.f32 %v636, %v639
    %v643 = vsub.f32 %v637, %v641
    %v644 = vmul.f32 %v642, 1.442695
    %v645 = vpow.pop %v644
    %v646 = vmul.f32 %v643, 1.442695
    %v647 = vpow.pop %v646
    %v648 = vsel %vm634, %v645, 0.0
    %v649 = vsel %vm635, %v647, 0.0
    %650 = vadd.xlane.f32.xlu0 %v648
    %v651 = vpop.xlane.xlu0 %650
    %652 = vadd.xlane.f32.xlu0 %v649
    %v653 = vpop.xlane.xlu0 %652
    %vm654 = vcmp.gt.f32.partialorder %v651, 0.0
    %vm655 = vcmp.gt.f32.partialorder %v653, 0.0
    %v656 = vsel %vm654, %v651, 1.0
    %v657 = vsel %vm655, %v653, 1.0
    %v658 = vrcp.pop %v656
    %v659 = vrcp.pop %v657
    %v660 = vmul.f32 %v648, %v658
    %v661 = vmul.f32 %v649, %v659
    %662 = vst [vmem:[#allocation4] sm:$0xff] %v660
    %663 = vst [vmem:[#allocation4 + $0x8] sm:$0xff] %v661
    // Predicated region
    $region10: #{tpu_custom_call.1} parent=1 // pred_check
      _
    $region11: #{tpu_custom_call.1} parent=1 // pred_check_branch
      %665 = sbr.rel (0) target = $region13
    $region12: #{tpu_custom_call.1} parent=1 // pred_region
      %s667 = ssub.s32 256, 256
      %668 = vsyncadd [#allocation5], %s667
      %s669 = sshll.u32 [#allocation4], 4
      %s670 = int_to_ptr.vmem [resolvable:$true] %s669
      %675 = dma.vmem_to_hbm [thread:$0]  %s670, 256, %s3, [#allocation5], 128, 128, 8
    $region13: #{tpu_custom_call.1} parent=1 // pred_fallthru
      _
    // Predicated region
    $region14: #{tpu_custom_call.1} parent=1 // pred_check
      _
    $region15: #{tpu_custom_call.1} parent=1 // pred_check_branch
      %677 = sbr.rel (0) target = $region17
    $region16: #{tpu_custom_call.1} parent=1 // pred_region
      %678 = dma.done [#allocation5], 256
    $region17: #{tpu_custom_call.1} parent=1 // pred_fallthru
      _
    %679 = vsyncpa [#allocation5], 1

</llo_original>
